<compile_context>
chip_gen: v7x
topology: tpu7x:2x2x1
jax: 0.10.0
libtpu: 0.0.40
codegen_flags: <defaults>
</compile_context>

<pallas_src>
import jax
import jax.numpy as jnp
from jax.experimental import pallas as pl
from jax.experimental.pallas import tpu as pltpu

N = 64            # number of graph nodes
OUT_DIM = 32      # gat1: OUT_DIM -> OUT_DIM
OUT_DIM2 = 16     # gat2: OUT_DIM -> OUT_DIM2
NEG_SLOPE = 0.2   # LeakyReLU slope used by standard GATConv
DROP_P = 0.3      # F.dropout(p=0.3), training=True (F.dropout default)
MASK_VAL = -9e15  # additive mask for non-edges


def _gat_layer(x, adj_bias, w_aug, d_out):
    """One single-head GAT layer, all in VMEM.

    w_aug = concat([W, W@a_src, W@a_dst], axis=1)  ->  one fused MXU matmul.
    """
    z = jnp.dot(x, w_aug, preferred_element_type=jnp.float32)      # (N, d_out+2)
    wh = z[:, :d_out]                                               # (N, d_out)
    f_src = z[:, d_out:d_out + 1]                                   # (N, 1)
    f_dst = z[:, d_out + 1:d_out + 2]                               # (N, 1)

    e = f_src + f_dst.T                                             # (N, N) logits
    e = jnp.where(e > 0, e, NEG_SLOPE * e)                          # LeakyReLU
    e = e + adj_bias                                                # mask non-edges
    e = e - jnp.max(e, axis=1, keepdims=True)                       # softmax over dim=1
    p = jnp.exp(e)
    row_sum = jnp.sum(p, axis=1, keepdims=True)                     # (N, 1)

    out = jnp.dot(p, wh, preferred_element_type=jnp.float32)        # (N, d_out)
    return out * pl.reciprocal(row_sum, approx=True)                # normalize post-matmul


def item_gat_kernel(e_ref, bias_ref, drop_ref, w1_ref, w2_ref, out_ref):
    x = e_ref[0]          # (N, OUT_DIM)
    adj_bias = bias_ref[0]  # (N, N)  0 on edges, -9e15 elsewhere

    # x1 = relu(gat1(E, A))
    x1 = jnp.maximum(_gat_layer(x, adj_bias, w1_ref[...], OUT_DIM), 0.0)

    # x1 = F.dropout(x1, p=0.3)  (inverted dropout; mask pre-scaled by 1/(1-p))
    x1 = x1 * drop_ref[0]

    # x2 = relu(gat2(x1, A))
    x2 = jnp.maximum(_gat_layer(x1, adj_bias, w2_ref[...], OUT_DIM2), 0.0)

    out_ref[0] = x2


def item_gat(E, A, params, dropout_key):
    """Batched ItemGAT forward.

    E: (B, N, OUT_DIM) node features, A: (B, N, N) dense adjacency (float).
    Dropout is always applied (training-mode F.dropout semantics).
    """
    B = E.shape[0]

    # --- wrapper-side precomputation (tiny, done once per call) ---
    adj_bias = jnp.where(A > 0, 0.0, MASK_VAL).astype(jnp.float32)          # (B, N, N)

    keep = jax.random.bernoulli(dropout_key, 1.0 - DROP_P, (B, N, OUT_DIM))
    drop_mul = keep.astype(jnp.float32) * jnp.float32(1.0 / (1.0 - DROP_P))  # (B, N, OUT_DIM)

    w_aug1 = jnp.concatenate(
        [params["w1"],
         jnp.dot(params["w1"], params["a1_src"]),
         jnp.dot(params["w1"], params["a1_dst"])], axis=1)                   # (32, 34)
    w_aug2 = jnp.concatenate(
        [params["w2"],
         jnp.dot(params["w2"], params["a2_src"]),
         jnp.dot(params["w2"], params["a2_dst"])], axis=1)                   # (32, 18)

    return pl.pallas_call(
        item_gat_kernel,
        out_shape=jax.ShapeDtypeStruct((B, N, OUT_DIM2), jnp.float32),
        grid=(B,),
        in_specs=[
            pl.BlockSpec((1, N, OUT_DIM), lambda b: (b, 0, 0)),   # E
            pl.BlockSpec((1, N, N), lambda b: (b, 0, 0)),         # adjacency bias
            pl.BlockSpec((1, N, OUT_DIM), lambda b: (b, 0, 0)),   # dropout multiplier
            pl.BlockSpec(w_aug1.shape, lambda b: (0, 0)),         # fused gat1 weights
            pl.BlockSpec(w_aug2.shape, lambda b: (0, 0)),         # fused gat2 weights
        ],
        out_specs=pl.BlockSpec((1, N, OUT_DIM2), lambda b: (b, 0, 0)),
        compiler_params=pltpu.CompilerParams(
            dimension_semantics=("parallel",)),
    )(E, adj_bias, drop_mul, w_aug1, w_aug2)


def init_params(key):
    k = jax.random.split(key, 6)

    def xavier(rng, shape):
        fan_in, fan_out = shape[0], shape[1]
        scale = jnp.sqrt(6.0 / (fan_in + fan_out))
        return jax.random.uniform(rng, shape, jnp.float32, -scale, scale)

    return {
        "w1":     xavier(k[0], (OUT_DIM, OUT_DIM)),
        "a1_src": xavier(k[1], (OUT_DIM, 1)),
        "a1_dst": xavier(k[2], (OUT_DIM, 1)),
        "w2":     xavier(k[3], (OUT_DIM, OUT_DIM2)),
        "a2_src": xavier(k[4], (OUT_DIM2, 1)),
        "a2_dst": xavier(k[5], (OUT_DIM2, 1)),
    }


if __name__ == "__main__":
    key = jax.random.PRNGKey(0)
    k_e, k_a, k_p, k_d = jax.random.split(key, 4)

    B = 2
    E = jax.random.normal(k_e, (B, N, OUT_DIM), dtype=jnp.float32)
    # Random sparse adjacency with self-loops, stored dense as float32.
    A = (jax.random.uniform(k_a, (B, N, N)) < 0.2).astype(jnp.float32)
    A = jnp.maximum(A, jnp.eye(N, dtype=jnp.float32)[None])

    params = init_params(k_p)

    out = item_gat(E, A, params, dropout_key=k_d)
    out = jax.block_until_ready(out)
    assert out.shape == (B, N, OUT_DIM2) and out.dtype == jnp.float32
    assert bool(jnp.all(jnp.isfinite(out)))
    print("KERNEL_OK")
</pallas_src>

<mosaic_0001>
module attributes {stable_mosaic.version = 11 : i64} {
  func.func @item_gat_kernel(%arg0: i32, %arg1: memref<1x64x32xf32, #tpu.memory_space<vmem>>, %arg2: memref<1x64x64xf32, #tpu.memory_space<vmem>>, %arg3: memref<1x64x32xf32, #tpu.memory_space<vmem>>, %arg4: memref<32x34xf32, #tpu.memory_space<vmem>>, %arg5: memref<32x18xf32, #tpu.memory_space<vmem>>, %arg6: memref<1x64x16xf32, #tpu.memory_space<vmem>>) attributes {dimension_semantics = [#tpu.dimension_semantics<parallel>], iteration_bounds = array<i64: 2>, scalar_prefetch = 0 : i64, scratch_operands = 0 : i64, tpu.core_type = #tpu.core_type<tc>, window_params = [{transform_indices = @transform_0, window_bounds = array<i64: 1, 64, 32>}, {transform_indices = @transform_1, window_bounds = array<i64: 1, 64, 64>}, {transform_indices = @transform_2, window_bounds = array<i64: 1, 64, 32>}, {pipeline_mode = #tpu.pipeline_mode<synchronous>, transform_indices = @transform_3, window_bounds = array<i64: 32, 34>}, {pipeline_mode = #tpu.pipeline_mode<synchronous>, transform_indices = @transform_4, window_bounds = array<i64: 32, 18>}, {transform_indices = @transform_5, window_bounds = array<i64: 1, 64, 16>}]} {
    %c0 = arith.constant 0 : index
    %c0_0 = arith.constant 0 : index
    %c0_1 = arith.constant 0 : index
    %0 = vector.load %arg1[%c0, %c0_0, %c0_1] : memref<1x64x32xf32, #tpu.memory_space<vmem>>, vector<1x64x32xf32>
    %1 = vector.shape_cast %0 : vector<1x64x32xf32> to vector<64x32xf32>
    %c0_2 = arith.constant 0 : index
    %c0_3 = arith.constant 0 : index
    %c0_4 = arith.constant 0 : index
    %2 = vector.load %arg2[%c0_2, %c0_3, %c0_4] : memref<1x64x64xf32, #tpu.memory_space<vmem>>, vector<1x64x64xf32>
    %3 = vector.shape_cast %2 : vector<1x64x64xf32> to vector<64x64xf32>
    %c0_5 = arith.constant 0 : index
    %c0_6 = arith.constant 0 : index
    %4 = vector.load %arg4[%c0_5, %c0_6] : memref<32x34xf32, #tpu.memory_space<vmem>>, vector<32x34xf32>
    %cst = arith.constant dense<0.000000e+00> : vector<64x34xf32>
    %5 = tpu.matmul %1, %4, %cst {dimension_numbers = #tpu.dot_dimension_numbers<[1], [0], [0], [1], [0, 0, 1, 1], [], []>} : vector<64x32xf32>, vector<32x34xf32>, vector<64x34xf32> -> vector<64x34xf32>
    %6 = vector.extract_strided_slice %5 {offsets = [0, 0], sizes = [64, 32], strides = [1, 1]} : vector<64x34xf32> to vector<64x32xf32>
    %7 = vector.extract_strided_slice %5 {offsets = [0, 32], sizes = [64, 1], strides = [1, 1]} : vector<64x34xf32> to vector<64x1xf32>
    %8 = vector.extract_strided_slice %5 {offsets = [0, 33], sizes = [64, 1], strides = [1, 1]} : vector<64x34xf32> to vector<64x1xf32>
    %9 = tpu.transpose %8, [1, 0] : vector<64x1xf32> -> vector<1x64xf32>
    %10 = vector.broadcast %7 : vector<64x1xf32> to vector<64x64xf32>
    %11 = vector.broadcast %9 : vector<1x64xf32> to vector<64x64xf32>
    %12 = arith.addf %10, %11 : vector<64x64xf32>
    %cst_7 = arith.constant 0.000000e+00 : f32
    %13 = vector.broadcast %cst_7 : f32 to vector<64x64xf32>
    %14 = arith.cmpf ogt, %12, %13 : vector<64x64xf32>
    %cst_8 = arith.constant 2.000000e-01 : f32
    %15 = vector.broadcast %cst_8 : f32 to vector<64x64xf32>
    %16 = arith.mulf %15, %12 : vector<64x64xf32>
    %17 = arith.select %14, %12, %16 : vector<64x64xi1>, vector<64x64xf32>
    %18 = arith.addf %17, %3 : vector<64x64xf32>
    %cst_9 = arith.constant dense<0xFF800000> : vector<64xf32>
    %19 = vector.multi_reduction <maximumf>, %18, %cst_9 [1] : vector<64x64xf32> to vector<64xf32>
    %20 = vector.shape_cast %19 : vector<64xf32> to vector<64x1xf32>
    %21 = vector.broadcast %20 : vector<64x1xf32> to vector<64x64xf32>
    %22 = arith.subf %18, %21 : vector<64x64xf32>
    %23 = math.exp %22 : vector<64x64xf32>
    %cst_10 = arith.constant dense<0.000000e+00> : vector<64xf32>
    %24 = vector.multi_reduction <add>, %23, %cst_10 [1] : vector<64x64xf32> to vector<64xf32>
    %25 = vector.shape_cast %24 : vector<64xf32> to vector<64x1xf32>
    %cst_11 = arith.constant dense<0.000000e+00> : vector<64x32xf32>
    %26 = tpu.matmul %23, %6, %cst_11 {dimension_numbers = #tpu.dot_dimension_numbers<[1], [0], [0], [1], [0, 0, 1, 1], [], []>} : vector<64x64xf32>, vector<64x32xf32>, vector<64x32xf32> -> vector<64x32xf32>
    %27 = tpu.reciprocal %25 {approx = true} : vector<64x1xf32> -> vector<64x1xf32>
    %28 = vector.broadcast %27 : vector<64x1xf32> to vector<64x32xf32>
    %29 = arith.mulf %26, %28 : vector<64x32xf32>
    %cst_12 = arith.constant 0.000000e+00 : f32
    %30 = vector.broadcast %cst_12 : f32 to vector<64x32xf32>
    %31 = arith.maximumf %29, %30 : vector<64x32xf32>
    %c0_13 = arith.constant 0 : index
    %c0_14 = arith.constant 0 : index
    %c0_15 = arith.constant 0 : index
    %32 = vector.load %arg3[%c0_13, %c0_14, %c0_15] : memref<1x64x32xf32, #tpu.memory_space<vmem>>, vector<1x64x32xf32>
    %33 = vector.shape_cast %32 : vector<1x64x32xf32> to vector<64x32xf32>
    %34 = arith.mulf %31, %33 : vector<64x32xf32>
    %c0_16 = arith.constant 0 : index
    %c0_17 = arith.constant 0 : index
    %35 = vector.load %arg5[%c0_16, %c0_17] : memref<32x18xf32, #tpu.memory_space<vmem>>, vector<32x18xf32>
    %cst_18 = arith.constant dense<0.000000e+00> : vector<64x18xf32>
    %36 = tpu.matmul %34, %35, %cst_18 {dimension_numbers = #tpu.dot_dimension_numbers<[1], [0], [0], [1], [0, 0, 1, 1], [], []>} : vector<64x32xf32>, vector<32x18xf32>, vector<64x18xf32> -> vector<64x18xf32>
    %37 = vector.extract_strided_slice %36 {offsets = [0, 0], sizes = [64, 16], strides = [1, 1]} : vector<64x18xf32> to vector<64x16xf32>
    %38 = vector.extract_strided_slice %36 {offsets = [0, 16], sizes = [64, 1], strides = [1, 1]} : vector<64x18xf32> to vector<64x1xf32>
    %39 = vector.extract_strided_slice %36 {offsets = [0, 17], sizes = [64, 1], strides = [1, 1]} : vector<64x18xf32> to vector<64x1xf32>
    %40 = tpu.transpose %39, [1, 0] : vector<64x1xf32> -> vector<1x64xf32>
    %41 = vector.broadcast %38 : vector<64x1xf32> to vector<64x64xf32>
    %42 = vector.broadcast %40 : vector<1x64xf32> to vector<64x64xf32>
    %43 = arith.addf %41, %42 : vector<64x64xf32>
    %cst_19 = arith.constant 0.000000e+00 : f32
    %44 = vector.broadcast %cst_19 : f32 to vector<64x64xf32>
    %45 = arith.cmpf ogt, %43, %44 : vector<64x64xf32>
    %cst_20 = arith.constant 2.000000e-01 : f32
    %46 = vector.broadcast %cst_20 : f32 to vector<64x64xf32>
    %47 = arith.mulf %46, %43 : vector<64x64xf32>
    %48 = arith.select %45, %43, %47 : vector<64x64xi1>, vector<64x64xf32>
    %49 = arith.addf %48, %3 : vector<64x64xf32>
    %cst_21 = arith.constant dense<0xFF800000> : vector<64xf32>
    %50 = vector.multi_reduction <maximumf>, %49, %cst_21 [1] : vector<64x64xf32> to vector<64xf32>
    %51 = vector.shape_cast %50 : vector<64xf32> to vector<64x1xf32>
    %52 = vector.broadcast %51 : vector<64x1xf32> to vector<64x64xf32>
    %53 = arith.subf %49, %52 : vector<64x64xf32>
    %54 = math.exp %53 : vector<64x64xf32>
    %cst_22 = arith.constant dense<0.000000e+00> : vector<64xf32>
    %55 = vector.multi_reduction <add>, %54, %cst_22 [1] : vector<64x64xf32> to vector<64xf32>
    %56 = vector.shape_cast %55 : vector<64xf32> to vector<64x1xf32>
    %cst_23 = arith.constant dense<0.000000e+00> : vector<64x16xf32>
    %57 = tpu.matmul %54, %37, %cst_23 {dimension_numbers = #tpu.dot_dimension_numbers<[1], [0], [0], [1], [0, 0, 1, 1], [], []>} : vector<64x64xf32>, vector<64x16xf32>, vector<64x16xf32> -> vector<64x16xf32>
    %58 = tpu.reciprocal %56 {approx = true} : vector<64x1xf32> -> vector<64x1xf32>
    %59 = vector.broadcast %58 : vector<64x1xf32> to vector<64x16xf32>
    %60 = arith.mulf %57, %59 : vector<64x16xf32>
    %cst_24 = arith.constant 0.000000e+00 : f32
    %61 = vector.broadcast %cst_24 : f32 to vector<64x16xf32>
    %62 = arith.maximumf %60, %61 : vector<64x16xf32>
    %c0_25 = arith.constant 0 : index
    %c0_26 = arith.constant 0 : index
    %c0_27 = arith.constant 0 : index
    %63 = vector.load %arg6[%c0_25, %c0_26, %c0_27] : memref<1x64x16xf32, #tpu.memory_space<vmem>>, vector<1x64x16xf32>
    %64 = vector.shape_cast %63 : vector<1x64x16xf32> to vector<64x16xf32>
    %65 = vector.shape_cast %62 : vector<64x16xf32> to vector<1x64x16xf32>
    tpu.vector_store %arg6[%c0_25, %c0_26, %c0_27], %65 {strides = array<i32>} : memref<1x64x16xf32, #tpu.memory_space<vmem>>, vector<1x64x16xf32>,
    return
  }
  func.func @transform_0(%arg0: i32) -> (i32, i32, i32) {
    %c0_i32 = arith.constant 0 : i32
    %c0_i32_0 = arith.constant 0 : i32
    %c0_i32_1 = arith.constant 0 : i32
    return %arg0, %c0_i32, %c0_i32_0 : i32, i32, i32
  }
  func.func @transform_1(%arg0: i32) -> (i32, i32, i32) {
    %c0_i32 = arith.constant 0 : i32
    %c0_i32_0 = arith.constant 0 : i32
    %c0_i32_1 = arith.constant 0 : i32
    return %arg0, %c0_i32, %c0_i32_0 : i32, i32, i32
  }
  func.func @transform_2(%arg0: i32) -> (i32, i32, i32) {
    %c0_i32 = arith.constant 0 : i32
    %c0_i32_0 = arith.constant 0 : i32
    %c0_i32_1 = arith.constant 0 : i32
    return %arg0, %c0_i32, %c0_i32_0 : i32, i32, i32
  }
  func.func @transform_3(%arg0: i32) -> (i32, i32) {
    %c0_i32 = arith.constant 0 : i32
    %c0_i32_0 = arith.constant 0 : i32
    %c0_i32_1 = arith.constant 0 : i32
    return %c0_i32, %c0_i32_0 : i32, i32
  }
  func.func @transform_4(%arg0: i32) -> (i32, i32) {
    %c0_i32 = arith.constant 0 : i32
    %c0_i32_0 = arith.constant 0 : i32
    %c0_i32_1 = arith.constant 0 : i32
    return %c0_i32, %c0_i32_0 : i32, i32
  }
  func.func @transform_5(%arg0: i32) -> (i32, i32, i32) {
    %c0_i32 = arith.constant 0 : i32
    %c0_i32_0 = arith.constant 0 : i32
    %c0_i32_1 = arith.constant 0 : i32
    return %arg0, %c0_i32, %c0_i32_0 : i32, i32, i32
  }
}

</mosaic_0001>

<llo_original>
// kernel: tpu_custom_call.1
$region0: #{tpu_custom_call.1}
  #allocation0 [shape = 'u32[]', space=smem, size = 0x4, offset = 0x4, fixed_abs, tag = 'smem constant byte address 0x4 - core index']
  #allocation1 [shape = 'u32[144,128]{1,0:T(1,128)}', space=vmem, size = 0x12000, scoped, tag = 'internal scratch']
  %s0 = inlined_call_operand.vmem [shape: f32[2,64,32], index: 0, kind: input, shape index: {}]
  %s1 = inlined_call_operand.vmem [shape: f32[2,64,64], index: 1, kind: input, shape index: {}]
  %s2 = inlined_call_operand.vmem [shape: f32[2,64,32], index: 2, kind: input, shape index: {}]
  %s3 = inlined_call_operand.vmem [shape: f32[32,34], index: 3, kind: input, shape index: {}]
  %s4 = inlined_call_operand.vmem [shape: f32[32,18], index: 4, kind: input, shape index: {}]
  %s5 = inlined_call_operand.vmem [shape: f32[2,64,16], index: 5, kind: output, shape index: {}]
  %s6 = sld [smem:[#allocation0]]
  $region53: #{tpu_custom_call.1} parent=0
    _
  %s8 = ssub.s32 1, %s6
  %s9 = scalar_select 0, %s8, %s6
  loop: start=0, step=1, limit=4
  $region2: #{tpu_custom_call.1} parent=0 // loop_pre_header
    _
  $region3: #{tpu_custom_call.1} parent=0 // loop_header
    %s11 = sphi 0, %s15
    %p12 = scmp.ge.s32.totalorder %s11, 4
    %s21 = sphi 0, %s23
    %s24 = sphi 0, %s21
    %s25 = sphi 0, %s24
    %s41 = sphi 0, %s25
    %s47 = sphi 0, %s49
    %s50 = sphi 0, %s47
    %s51 = sphi 0, %s50
    %s67 = sphi 0, %s51
    %s73 = sphi 0, %s75
    %s76 = sphi 0, %s73
    %s77 = sphi 0, %s76
    %s93 = sphi 0, %s77
    %s97 = sphi 0, %s97
    %s99 = sphi 0, %s97
    %s100 = sphi 0, %s99
    %s114 = sphi 0, %s100
    %s118 = sphi 0, %s118
    %s120 = sphi 0, %s118
    %s121 = sphi 0, %s120
    %s135 = sphi 0, %s121
    %s141 = sphi 0, %s143
    %s144 = sphi 0, %s141
    %s145 = sphi 0, %s144
    %s161 = sphi 0, %s145
  $region4: #{tpu_custom_call.1} parent=0 // loop_header_branch
    %14 = sbr.rel (%p12) target = $region8
  $region5: #{tpu_custom_call.1} parent=0 // loop_body
    %s16 = ssub.s32 %s11, 1
    %s17 = ssub.s32 %s11, 2
    %s18 = sadd.s32 %s11, 1
    %s19 = ssub.s32 %s11, %s18
    %p20 = scmp.eq.s32.totalorder %s19, 0
    %s22 = sadd.s32 %s21, 1
    %s23 = scalar_select %p20, %s21, %s22
    %p26 = pneg %p20
    %p27 = scmp.eq.s32.totalorder %s11, 1
    %p28 = por %p26, %p27
    %p29 = scmp.ne.s32.totalorder %s21, %s24
    %p30 = scmp.eq.s32.totalorder %s11, 0
    %p31 = por %p29, %p30
    %p32 = scmp.ne.s32.totalorder %s21, %s24
    %p33 = scmp.eq.s32.totalorder %s16, 1
    %p34 = por %p32, %p33
    %p35 = scmp.ne.s32.totalorder %s24, %s25
    %p36 = scmp.eq.s32.totalorder %s16, 0
    %p37 = por %p35, %p36
    %p38 = scmp.ne.s32.totalorder %s24, %s25
    %p39 = scmp.eq.s32.totalorder %s17, 1
    %p40 = por %p38, %p39
    %p42 = scmp.ne.s32.totalorder %s25, %s41
    %p43 = scmp.eq.s32.totalorder %s17, 0
    %p44 = por %p42, %p43
    %s45 = ssub.s32 %s11, %s18
    %p46 = scmp.eq.s32.totalorder %s45, 0
    %s48 = sadd.s32 %s47, 1
    %s49 = scalar_select %p46, %s47, %s48
    %p52 = pneg %p46
    %p53 = scmp.eq.s32.totalorder %s11, 1
    %p54 = por %p52, %p53
    %p55 = scmp.ne.s32.totalorder %s47, %s50
    %p56 = scmp.eq.s32.totalorder %s11, 0
    %p57 = por %p55, %p56
    %p58 = scmp.ne.s32.totalorder %s47, %s50
    %p59 = scmp.eq.s32.totalorder %s16, 1
    %p60 = por %p58, %p59
    %p61 = scmp.ne.s32.totalorder %s50, %s51
    %p62 = scmp.eq.s32.totalorder %s16, 0
    %p63 = por %p61, %p62
    %p64 = scmp.ne.s32.totalorder %s50, %s51
    %p65 = scmp.eq.s32.totalorder %s17, 1
    %p66 = por %p64, %p65
    %p68 = scmp.ne.s32.totalorder %s51, %s67
    %p69 = scmp.eq.s32.totalorder %s17, 0
    %p70 = por %p68, %p69
    %s71 = ssub.s32 %s11, %s18
    %p72 = scmp.eq.s32.totalorder %s71, 0
    %s74 = sadd.s32 %s73, 1
    %s75 = scalar_select %p72, %s73, %s74
    %p78 = pneg %p72
    %p79 = scmp.eq.s32.totalorder %s11, 1
    %p80 = por %p78, %p79
    %p81 = scmp.ne.s32.totalorder %s73, %s76
    %p82 = scmp.eq.s32.totalorder %s11, 0
    %p83 = por %p81, %p82
    %p84 = scmp.ne.s32.totalorder %s73, %s76
    %p85 = scmp.eq.s32.totalorder %s16, 1
    %p86 = por %p84, %p85
    %p87 = scmp.ne.s32.totalorder %s76, %s77
    %p88 = scmp.eq.s32.totalorder %s16, 0
    %p89 = por %p87, %p88
    %p90 = scmp.ne.s32.totalorder %s76, %s77
    %p91 = scmp.eq.s32.totalorder %s17, 1
    %p92 = por %p90, %p91
    %p94 = scmp.ne.s32.totalorder %s77, %s93
    %p95 = scmp.eq.s32.totalorder %s17, 0
    %p96 = por %p94, %p95
    %s98 = sadd.s32 %s97, 1
    %p101 = scmp.eq.s32.totalorder %s11, 1
    %p102 = scmp.ne.s32.totalorder %s97, %s99
    %p103 = scmp.eq.s32.totalorder %s11, 0
    %p104 = por %p102, %p103
    %p105 = scmp.ne.s32.totalorder %s97, %s99
    %p106 = scmp.eq.s32.totalorder %s16, 1
    %p107 = por %p105, %p106
    %p108 = scmp.ne.s32.totalorder %s99, %s100
    %p109 = scmp.eq.s32.totalorder %s16, 0
    %p110 = por %p108, %p109
    %p111 = scmp.ne.s32.totalorder %s99, %s100
    %p112 = scmp.eq.s32.totalorder %s17, 1
    %p113 = por %p111, %p112
    %p115 = scmp.ne.s32.totalorder %s100, %s114
    %p116 = scmp.eq.s32.totalorder %s17, 0
    %p117 = por %p115, %p116
    %s119 = sadd.s32 %s118, 1
    %p122 = scmp.eq.s32.totalorder %s11, 1
    %p123 = scmp.ne.s32.totalorder %s118, %s120
    %p124 = scmp.eq.s32.totalorder %s11, 0
    %p125 = por %p123, %p124
    %p126 = scmp.ne.s32.totalorder %s118, %s120
    %p127 = scmp.eq.s32.totalorder %s16, 1
    %p128 = por %p126, %p127
    %p129 = scmp.ne.s32.totalorder %s120, %s121
    %p130 = scmp.eq.s32.totalorder %s16, 0
    %p131 = por %p129, %p130
    %p132 = scmp.ne.s32.totalorder %s120, %s121
    %p133 = scmp.eq.s32.totalorder %s17, 1
    %p134 = por %p132, %p133
    %p136 = scmp.ne.s32.totalorder %s121, %s135
    %p137 = scmp.eq.s32.totalorder %s17, 0
    %p138 = por %p136, %p137
    %s139 = ssub.s32 %s11, %s18
    %p140 = scmp.eq.s32.totalorder %s139, 0
    %s142 = sadd.s32 %s141, 1
    %s143 = scalar_select %p140, %s141, %s142
    %p146 = pneg %p140
    %p147 = scmp.eq.s32.totalorder %s11, 1
    %p148 = por %p146, %p147
    %p149 = scmp.ne.s32.totalorder %s141, %s144
    %p150 = scmp.eq.s32.totalorder %s11, 0
    %p151 = por %p149, %p150
    %p152 = scmp.ne.s32.totalorder %s141, %s144
    %p153 = scmp.eq.s32.totalorder %s16, 1
    %p154 = por %p152, %p153
    %p155 = scmp.ne.s32.totalorder %s144, %s145
    %p156 = scmp.eq.s32.totalorder %s16, 0
    %p157 = por %p155, %p156
    %p158 = scmp.ne.s32.totalorder %s144, %s145
    %p159 = scmp.eq.s32.totalorder %s17, 1
    %p160 = por %p158, %p159
    %p162 = scmp.ne.s32.totalorder %s145, %s161
    %p163 = scmp.eq.s32.totalorder %s17, 0
    %p164 = por %p162, %p163
    %p165 = scmp.le.s32.totalorder 1, %s11
    %p166 = scmp.lt.s32.totalorder %s11, 3
    %p167 = pnand %p165, %p166
    %p168 = pneg %p167
    // Predicated region
    $region9: #{tpu_custom_call.1} parent=5 // pred_check
      _
    $region10: #{tpu_custom_call.1} parent=5 // pred_check_branch
      %170 = sbr.rel (%p167) target = $region12
    $region11: #{tpu_custom_call.1} parent=5 // pred_region
      %s171 = ssub.s32 %s11, 1
      // Predicated region
      $region13: #{tpu_custom_call.1} parent=11 // pred_check
        %p172 = pneg %p110
      $region14: #{tpu_custom_call.1} parent=11 // pred_check_branch
        %174 = sbr.rel (%p172) target = $region16
      $region15: #{tpu_custom_call.1} parent=11 // pred_region
        _
      $region16: #{tpu_custom_call.1} parent=11 // pred_fallthru
        _
      // Predicated region
      $region17: #{tpu_custom_call.1} parent=11 // pred_check
        %p175 = pneg %p131
      $region18: #{tpu_custom_call.1} parent=11 // pred_check_branch
        %177 = sbr.rel (%p175) target = $region20
      $region19: #{tpu_custom_call.1} parent=11 // pred_region
        _
      $region20: #{tpu_custom_call.1} parent=11 // pred_fallthru
        _
    $region12: #{tpu_custom_call.1} parent=5 // pred_fallthru
      _
    %p178 = scmp.lt.s32.totalorder %s11, 2
    // Predicated region
    $region21: #{tpu_custom_call.1} parent=5 // pred_check
      %p179 = pneg %p178
    $region22: #{tpu_custom_call.1} parent=5 // pred_check_branch
      %181 = sbr.rel (%p179) target = $region24
    $region23: #{tpu_custom_call.1} parent=5 // pred_region
      // Predicated region
      $region25: #{tpu_custom_call.1} parent=23 // pred_check
        %p182 = pneg %p31
      $region26: #{tpu_custom_call.1} parent=23 // pred_check_branch
        %184 = sbr.rel (%p182) target = $region28
      $region27: #{tpu_custom_call.1} parent=23 // pred_region
        %p185 = scmp.lt.s32.totalorder %s11, 1
        %s186 = scalar_select %p185, %s11, 1
        %s187 = smul.addr %s186, 8
        %s188 = smul.addr %s187, 8
        %s189 = scalar_lea.vmem %s0, %s188
      $region28: #{tpu_custom_call.1} parent=23 // pred_fallthru
        _
      // Predicated region
      $region29: #{tpu_custom_call.1} parent=23 // pred_check
        %p190 = pneg %p57
      $region30: #{tpu_custom_call.1} parent=23 // pred_check_branch
        %192 = sbr.rel (%p190) target = $region32
      $region31: #{tpu_custom_call.1} parent=23 // pred_region
        %p193 = scmp.lt.s32.totalorder %s11, 1
        %s194 = scalar_select %p193, %s11, 1
        %s195 = smul.addr %s194, 8
        %s196 = smul.addr %s195, 8
        %s197 = scalar_lea.vmem %s1, %s196
      $region32: #{tpu_custom_call.1} parent=23 // pred_fallthru
        _
      // Predicated region
      $region33: #{tpu_custom_call.1} parent=23 // pred_check
        %p198 = pneg %p83
      $region34: #{tpu_custom_call.1} parent=23 // pred_check_branch
        %200 = sbr.rel (%p198) target = $region36
      $region35: #{tpu_custom_call.1} parent=23 // pred_region
        %p201 = scmp.lt.s32.totalorder %s11, 1
        %s202 = scalar_select %p201, %s11, 1
        %s203 = smul.addr %s202, 8
        %s204 = smul.addr %s203, 8
        %s205 = scalar_lea.vmem %s2, %s204
      $region36: #{tpu_custom_call.1} parent=23 // pred_fallthru
        _
    $region24: #{tpu_custom_call.1} parent=5 // pred_fallthru
      _
    %p206 = scmp.le.s32.totalorder 1, %s11
    %p207 = scmp.lt.s32.totalorder %s11, 3
    %p208 = pnand %p206, %p207
    %p209 = pneg %p208
    // Predicated region
    $region37: #{tpu_custom_call.1} parent=5 // pred_check
      _
    $region38: #{tpu_custom_call.1} parent=5 // pred_check_branch
      %211 = sbr.rel (%p208) target = $region40
    $region39: #{tpu_custom_call.1} parent=5 // pred_region
      %s212 = ssub.s32 %s11, 1
      %p213 = scmp.lt.s32.totalorder %s16, 1
      %s214 = scalar_select %p213, %s16, 1
      %s215 = smul.addr %s214, 8
      %s216 = smul.addr %s215, 8
      %s217 = scalar_lea.vmem %s0, %s216
      %p218 = pneg %p37
      %p219 = pneg %p34
      %p220 = scmp.lt.s32.totalorder %s16, 1
      %s221 = scalar_select %p220, %s16, 1
      %s222 = smul.addr %s221, 8
      %s223 = smul.addr %s222, 8
      %s224 = scalar_lea.vmem %s1, %s223
      %p225 = pneg %p63
      %p226 = pneg %p60
      %p227 = scmp.lt.s32.totalorder %s16, 1
      %s228 = scalar_select %p227, %s16, 1
      %s229 = smul.addr %s228, 8
      %s230 = smul.addr %s229, 8
      %s231 = scalar_lea.vmem %s2, %s230
      %p232 = pneg %p89
      %p233 = pneg %p86
      %p234 = pneg %p110
      %p235 = pneg %p107
      %p236 = pneg %p131
      %p237 = pneg %p128
      %p238 = pneg %p157
      %p239 = pneg %p154
      %p240 = scmp.lt.s32.totalorder %s16, 1
      %s241 = scalar_select %p240, %s16, 1
      %s242 = smul.addr %s241, 8
      %s243 = smul.addr %s242, 8
      %s244 = scalar_lea.vmem %s5, %s243
      %p245 = scmp.lt.s32.totalorder %s16, 1
      %s246 = scalar_select %p245, %s16, 1
      %s247 = smul.addr %s246, 8
      %s248 = smul.addr %s247, 8
      %s249 = scalar_lea.vmem %s0, %s248
      %p250 = scmp.lt.s32.totalorder %s16, 1
      %s251 = scalar_select %p250, %s16, 1
      %s252 = smul.addr %s251, 8
      %s253 = smul.addr %s252, 8
      %s254 = scalar_lea.vmem %s1, %s253
      %p255 = scmp.lt.s32.totalorder %s16, 1
      %s256 = scalar_select %p255, %s16, 1
      %s257 = smul.addr %s256, 8
      %s258 = smul.addr %s257, 8
      %s259 = scalar_lea.vmem %s2, %s258
      %p260 = scmp.lt.s32.totalorder %s16, 1
      %s261 = scalar_select %p260, %s16, 1
      %s262 = smul.addr %s261, 8
      %s263 = smul.addr %s262, 8
      %s264 = scalar_lea.vmem %s5, %s263
      %v265 = vld [vmem:[%s249] sm:$0xff]
      %v266 = vld [vmem:[%s249 + $0x8] sm:$0xff]
      %v267 = vld [vmem:[%s249 + $0x10] sm:$0xff]
      %v268 = vld [vmem:[%s249 + $0x18] sm:$0xff]
      %v269 = vld [vmem:[%s249 + $0x20] sm:$0xff]
      %v270 = vld [vmem:[%s249 + $0x28] sm:$0xff]
      %v271 = vld [vmem:[%s249 + $0x30] sm:$0xff]
      %v272 = vld [vmem:[%s249 + $0x38] sm:$0xff]
      %v273 = vld [vmem:[%s254] sm:$0xff]
      %v274 = vld [vmem:[%s254 + $0x8] sm:$0xff]
      %v275 = vld [vmem:[%s254 + $0x10] sm:$0xff]
      %v276 = vld [vmem:[%s254 + $0x18] sm:$0xff]
      %v277 = vld [vmem:[%s254 + $0x20] sm:$0xff]
      %v278 = vld [vmem:[%s254 + $0x28] sm:$0xff]
      %v279 = vld [vmem:[%s254 + $0x30] sm:$0xff]
      %v280 = vld [vmem:[%s254 + $0x38] sm:$0xff]
      %v281 = vld [vmem:[%s3] sm:$0xff]
      %v282 = vld [vmem:[%s3 + $0x8] sm:$0xff]
      %v283 = vld [vmem:[%s3 + $0x10] sm:$0xff]
      %v284 = vld [vmem:[%s3 + $0x18] sm:$0xff]
      %vm285 = vcmask 261120
      %v287 = vsel %vm285, %v265, 0
      %v290 = vsel %vm285, %v266, 0
      %v293 = vsel %vm285, %v267, 0
      %v296 = vsel %vm285, %v268, 0
      %v299 = vsel %vm285, %v269, 0
      %v302 = vsel %vm285, %v270, 0
      %v305 = vsel %vm285, %v271, 0
      %v308 = vsel %vm285, %v272, 0
      %310 = vmatprep.subr.mxu0 0.0
      %311 = vmatpush1.msra.mxu0 %v281
      %312 = vmatprep.subr.mxu0 0.0
      %313 = vmatpush1.msra.mxu0 %v282
      %314 = vmatprep.subr.mxu0 0.0
      %315 = vmatpush1.msra.mxu0 %v283
      %316 = vmatprep.subr.mxu0 0.0
      %317 = vmatpush1.msra.mxu0 %v284
      %318 = vmatprep.subr.mxu0 0.0
      %319 = vmatpush1.msra.mxu0 0.0
      %320 = vmatprep.subr.mxu0 0.0
      %321 = vmatpush1.msra.mxu0 0.0
      %322 = vmatprep.subr.mxu0 0.0
      %323 = vmatpush1.msra.mxu0 0.0
      %324 = vmatprep.subr.mxu0 0.0
      %325 = vmatpush1.msra.mxu0 0.0
      %326 = vmatprep.subr.mxu0 0.0
      %327 = vmatpush1.msra.mxu0 0.0
      %328 = vmatprep.subr.mxu0 0.0
      %329 = vmatpush1.msra.mxu0 0.0
      %330 = vmatprep.subr.mxu0 0.0
      %331 = vmatpush1.msra.mxu0 0.0
      %332 = vmatprep.subr.mxu0 0.0
      %333 = vmatpush1.msra.mxu0 0.0
      %334 = vmatprep.subr.mxu0 0.0
      %335 = vmatpush1.msra.mxu0 0.0
      %336 = vmatprep.subr.mxu0 0.0
      %337 = vmatpush1.msra.mxu0 0.0
      %338 = vmatprep.subr.mxu0 0.0
      %339 = vmatpush1.msra.mxu0 0.0
      %340 = vmatprep.subr.mxu0 0.0
      %341 = vmatpush1.msra.mxu0 0.0
      %342 = vmatprep.subr.mxu0 0.0
      %343 = vmatpush1.msra.mxu0 0.0
      %344 = vmatprep.subr.mxu0 0.0
      %345 = vmatpush1.msra.mxu0 0.0
      %346 = vmatprep.subr.mxu0 0.0
      %347 = vmatpush1.msra.mxu0 0.0
      %348 = vmatprep.subr.mxu0 0.0
      %349 = vmatpush1.msra.mxu0 0.0
      %350 = vmatprep.subr.mxu0 0.0
      %351 = vmatpush1.msra.mxu0 0.0
      %352 = vmatprep.subr.mxu0 0.0
      %353 = vmatpush1.msra.mxu0 0.0
      %354 = vmatprep.subr.mxu0 0.0
      %355 = vmatpush1.msra.mxu0 0.0
      %356 = vmatprep.subr.mxu0 0.0
      %357 = vmatpush1.msra.mxu0 0.0
      %358 = vmatprep.subr.mxu0 0.0
      %359 = vmatpush1.msra.mxu0 0.0
      %360 = vmatprep.subr.mxu0 0.0
      %361 = vmatpush1.msra.mxu0 0.0
      %362 = vmatprep.subr.mxu0 0.0
      %363 = vmatpush1.msra.mxu0 0.0
      %364 = vmatprep.subr.mxu0 0.0
      %365 = vmatpush1.msra.mxu0 0.0
      %366 = vmatprep.subr.mxu0 0.0
      %367 = vmatpush1.msra.mxu0 0.0
      %368 = vmatprep.subr.mxu0 0.0
      %369 = vmatpush1.msra.mxu0 0.0
      %370 = vmatprep.subr.mxu0 0.0
      %371 = vmatpush1.msra.mxu0 0.0
      %372 = vmatprep.subr.mxu0 0.0
      %373 = vmatpush1.msra.mxu0 0.0
      %374 = vmatprep.mubr.f32.mxu0 0.0
      %375 = vmatmul.mubr.f32.gmra.mrb[0].mxu0 %v287
      %v376 = vpop.f32.mrb[0].mxu0
      %v377 = vadd.f32 0.0, %v376
      %v378 = vpop.f32.mrb[0].mxu0
      %379 = vmatprep.mubr.f32.mxu0 0.0
      %380 = vmatmul.mubr.f32.gmra.mrb[0].mxu0 %v290
      %v381 = vpop.f32.mrb[0].mxu0
      %v382 = vadd.f32 0.0, %v381
      %v383 = vpop.f32.mrb[0].mxu0
      %384 = vmatprep.mubr.f32.mxu0 0.0
      %385 = vmatmul.mubr.f32.gmra.mrb[0].mxu0 %v293
      %v386 = vpop.f32.mrb[0].mxu0
      %v387 = vadd.f32 0.0, %v386
      %v388 = vpop.f32.mrb[0].mxu0
      %389 = vmatprep.mubr.f32.mxu0 0.0
      %390 = vmatmul.mubr.f32.gmra.mrb[0].mxu0 %v296
      %v391 = vpop.f32.mrb[0].mxu0
      %v392 = vadd.f32 0.0, %v391
      %v393 = vpop.f32.mrb[0].mxu0
      %394 = vmatprep.mubr.f32.mxu0 0.0
      %395 = vmatmul.mubr.f32.gmra.mrb[0].mxu0 %v299
      %v396 = vpop.f32.mrb[0].mxu0
      %v397 = vadd.f32 0.0, %v396
      %v398 = vpop.f32.mrb[0].mxu0
      %399 = vmatprep.mubr.f32.mxu0 0.0
      %400 = vmatmul.mubr.f32.gmra.mrb[0].mxu0 %v302
      %v401 = vpop.f32.mrb[0].mxu0
      %v402 = vadd.f32 0.0, %v401
      %v403 = vpop.f32.mrb[0].mxu0
      %404 = vmatprep.mubr.f32.mxu0 0.0
      %405 = vmatmul.mubr.f32.gmra.mrb[0].mxu0 %v305
      %v406 = vpop.f32.mrb[0].mxu0
      %v407 = vadd.f32 0.0, %v406
      %v408 = vpop.f32.mrb[0].mxu0
      %409 = vmatprep.mubr.f32.mxu0 0.0
      %410 = vmatmul.mubr.f32.gmra.mrb[0].mxu0 %v308
      %v411 = vpop.f32.mrb[0].mxu0
      %v412 = vadd.f32 0.0, %v411
      %v413 = vpop.f32.mrb[0].mxu0
      %414 = vdwg.mxu0
      %423 = vrot.lane.b32.xlu0 %v377, 95
      %v424 = vpop.permute.xlu0 %423
      %425 = vrot.lane.b32.xlu0 %v382, 95
      %v426 = vpop.permute.xlu0 %425
      %427 = vrot.lane.b32.xlu0 %v387, 95
      %v428 = vpop.permute.xlu0 %427
      %429 = vrot.lane.b32.xlu0 %v392, 95
      %v430 = vpop.permute.xlu0 %429
      %431 = vrot.lane.b32.xlu0 %v397, 95
      %v432 = vpop.permute.xlu0 %431
      %433 = vrot.lane.b32.xlu0 %v402, 95
      %v434 = vpop.permute.xlu0 %433
      %435 = vrot.lane.b32.xlu0 %v407, 95
      %v436 = vpop.permute.xlu0 %435
      %437 = vrot.lane.b32.xlu0 %v412, 95
      %v438 = vpop.permute.xlu0 %437
      %447 = vxpose.xlu0.b32.start [1/16] %v424, 128
      %448 = vxpose.xlu0.b32.cont [2/16] %v426, 128
      %449 = vxpose.xlu0.b32.cont [3/16] %v428, 128
      %450 = vxpose.xlu0.b32.cont [4/16] %v430, 128
      %451 = vxpose.xlu0.b32.cont [5/16] %v432, 128
      %452 = vxpose.xlu0.b32.cont [6/16] %v434, 128
      %453 = vxpose.xlu0.b32.cont [7/16] %v436, 128
      %454 = vxpose.xlu0.b32.cont [8/16] %v438, 128
      %455 = vxpose.xlu0.b32.cont [9/16] 0.0, 128
      %456 = vxpose.xlu0.b32.cont [10/16] 0.0, 128
      %457 = vxpose.xlu0.b32.cont [11/16] 0.0, 128
      %458 = vxpose.xlu0.b32.cont [12/16] 0.0, 128
      %459 = vxpose.xlu0.b32.cont [13/16] 0.0, 128
      %460 = vxpose.xlu0.b32.cont [14/16] 0.0, 128
      %461 = vxpose.xlu0.b32.cont [15/16] 0.0, 128
      %462 = vxpose.xlu0.b32.end [16/16] 0.0, 128
      %v463 = vpop.trf.xlu0
      %v464 = vpop.trf.xlu0
      %v465 = vpop.trf.xlu0
      %v466 = vpop.trf.xlu0
      %v467 = vpop.trf.xlu0
      %v468 = vpop.trf.xlu0
      %v469 = vpop.trf.xlu0
      %v470 = vpop.trf.xlu0
      %v471 = vpop.trf.xlu0
      %v472 = vpop.trf.xlu0
      %v473 = vpop.trf.xlu0
      %v474 = vpop.trf.xlu0
      %v475 = vpop.trf.xlu0
      %v476 = vpop.trf.xlu0
      %v477 = vpop.trf.xlu0
      %v478 = vpop.trf.xlu0
      %479 = vset.pattern.permute.xlu0 32
      %480 = vperm.xlu0 %479, %v377
      %v481 = vpop.permute.xlu0 %480
      %483 = vset.pattern.permute.xlu0 32
      %484 = vperm.xlu0 %483, %v382
      %v485 = vpop.permute.xlu0 %484
      %487 = vset.pattern.permute.xlu0 32
      %488 = vperm.xlu0 %487, %v387
      %v489 = vpop.permute.xlu0 %488
      %491 = vset.pattern.permute.xlu0 32
      %492 = vperm.xlu0 %491, %v392
      %v493 = vpop.permute.xlu0 %492
      %495 = vset.pattern.permute.xlu0 32
      %496 = vperm.xlu0 %495, %v397
      %v497 = vpop.permute.xlu0 %496
      %499 = vset.pattern.permute.xlu0 32
      %500 = vperm.xlu0 %499, %v402
      %v501 = vpop.permute.xlu0 %500
      %503 = vset.pattern.permute.xlu0 32
      %504 = vperm.xlu0 %503, %v407
      %v505 = vpop.permute.xlu0 %504
      %507 = vset.pattern.permute.xlu0 32
      %508 = vperm.xlu0 %507, %v412
      %v509 = vpop.permute.xlu0 %508
      %v511 = vlaneseq
      %v512 = vshrl.u32 %v511, 7
      %v513 = vsub.s32 0, %v512
      %v514 = vrot.slane %v463, %v513
      %v515 = vadd.f32 %v481, %v514
      %v516 = vadd.f32 %v485, %v514
      %v517 = vadd.f32 %v489, %v514
      %v518 = vadd.f32 %v493, %v514
      %v519 = vadd.f32 %v497, %v514
      %v520 = vadd.f32 %v501, %v514
      %v521 = vadd.f32 %v505, %v514
      %v522 = vadd.f32 %v509, %v514
      %vm523 = vcmp.gt.f32.partialorder %v515, 0.0
      %vm524 = vcmp.gt.f32.partialorder %v516, 0.0
      %vm525 = vcmp.gt.f32.partialorder %v517, 0.0
      %vm526 = vcmp.gt.f32.partialorder %v518, 0.0
      %vm527 = vcmp.gt.f32.partialorder %v519, 0.0
      %vm528 = vcmp.gt.f32.partialorder %v520, 0.0
      %vm529 = vcmp.gt.f32.partialorder %v521, 0.0
      %vm530 = vcmp.gt.f32.partialorder %v522, 0.0
      %v531 = vmul.f32 %v515, 0.2
      %v532 = vmul.f32 %v516, 0.2
      %v533 = vmul.f32 %v517, 0.2
      %v534 = vmul.f32 %v518, 0.2
      %v535 = vmul.f32 %v519, 0.2
      %v536 = vmul.f32 %v520, 0.2
      %v537 = vmul.f32 %v521, 0.2
      %v538 = vmul.f32 %v522, 0.2
      %v539 = vsel %vm523, %v515, %v531
      %v540 = vsel %vm524, %v516, %v532
      %v541 = vsel %vm525, %v517, %v533
      %v542 = vsel %vm526, %v518, %v534
      %v543 = vsel %vm527, %v519, %v535
      %v544 = vsel %vm528, %v520, %v536
      %v545 = vsel %vm529, %v521, %v537
      %v546 = vsel %vm530, %v522, %v538
      %v547 = vadd.f32 %v539, %v273
      %v548 = vadd.f32 %v540, %v274
      %v549 = vadd.f32 %v541, %v275
      %v550 = vadd.f32 %v542, %v276
      %v551 = vadd.f32 %v543, %v277
      %v552 = vadd.f32 %v544, %v278
      %v553 = vadd.f32 %v545, %v279
      %v554 = vadd.f32 %v546, %v280
      %vm555 = vcmask 523264
      %v556 = vsel %vm555, %v547, -inf
      %557 = vmax.xlane.f32.xlu0 %v556
      %v558 = vpop.xlane.xlu0 %557
      %v559 = vsel %vm555, %v548, -inf
      %560 = vmax.xlane.f32.xlu0 %v559
      %v561 = vpop.xlane.xlu0 %560
      %v562 = vsel %vm555, %v549, -inf
      %563 = vmax.xlane.f32.xlu0 %v562
      %v564 = vpop.xlane.xlu0 %563
      %v565 = vsel %vm555, %v550, -inf
      %566 = vmax.xlane.f32.xlu0 %v565
      %v567 = vpop.xlane.xlu0 %566
      %v568 = vsel %vm555, %v551, -inf
      %569 = vmax.xlane.f32.xlu0 %v568
      %v570 = vpop.xlane.xlu0 %569
      %v571 = vsel %vm555, %v552, -inf
      %572 = vmax.xlane.f32.xlu0 %v571
      %v573 = vpop.xlane.xlu0 %572
      %v574 = vsel %vm555, %v553, -inf
      %575 = vmax.xlane.f32.xlu0 %v574
      %v576 = vpop.xlane.xlu0 %575
      %v577 = vsel %vm555, %v554, -inf
      %578 = vmax.xlane.f32.xlu0 %v577
      %v579 = vpop.xlane.xlu0 %578
      %v580 = vsub.f32 %v547, %v558
      %v581 = vsub.f32 %v548, %v561
      %v582 = vsub.f32 %v549, %v564
      %v583 = vsub.f32 %v550, %v567
      %v584 = vsub.f32 %v551, %v570
      %v585 = vsub.f32 %v552, %v573
      %v586 = vsub.f32 %v553, %v576
      %v587 = vsub.f32 %v554, %v579
      %v588 = vmul.f32 %v580, 1.442695
      %v589 = vpow.pop %v588
      %v590 = vmul.f32 %v581, 1.442695
      %v591 = vpow.pop %v590
      %v592 = vmul.f32 %v582, 1.442695
      %v593 = vpow.pop %v592
      %v594 = vmul.f32 %v583, 1.442695
      %v595 = vpow.pop %v594
      %v596 = vmul.f32 %v584, 1.442695
      %v597 = vpow.pop %v596
      %v598 = vmul.f32 %v585, 1.442695
      %v599 = vpow.pop %v598
      %v600 = vmul.f32 %v586, 1.442695
      %v601 = vpow.pop %v600
      %v602 = vmul.f32 %v587, 1.442695
      %v603 = vpow.pop %v602
      %v604 = vsel %vm555, %v589, 0.0
      %605 = vadd.xlane.f32.xlu0 %v604
      %v606 = vpop.xlane.xlu0 %605
      %v607 = vsel %vm555, %v591, 0.0
      %608 = vadd.xlane.f32.xlu0 %v607
      %v609 = vpop.xlane.xlu0 %608
      %v610 = vsel %vm555, %v593, 0.0
      %611 = vadd.xlane.f32.xlu0 %v610
      %v612 = vpop.xlane.xlu0 %611
      %v613 = vsel %vm555, %v595, 0.0
      %614 = vadd.xlane.f32.xlu0 %v613
      %v615 = vpop.xlane.xlu0 %614
      %v616 = vsel %vm555, %v597, 0.0
      %617 = vadd.xlane.f32.xlu0 %v616
      %v618 = vpop.xlane.xlu0 %617
      %v619 = vsel %vm555, %v599, 0.0
      %620 = vadd.xlane.f32.xlu0 %v619
      %v621 = vpop.xlane.xlu0 %620
      %v622 = vsel %vm555, %v601, 0.0
      %623 = vadd.xlane.f32.xlu0 %v622
      %v624 = vpop.xlane.xlu0 %623
      %v625 = vsel %vm555, %v603, 0.0
      %626 = vadd.xlane.f32.xlu0 %v625
      %v627 = vpop.xlane.xlu0 %626
      %v629 = vsel %vm555, %v589, 0
      %v632 = vsel %vm555, %v591, 0
      %v635 = vsel %vm555, %v593, 0
      %v638 = vsel %vm555, %v595, 0
      %v641 = vsel %vm555, %v597, 0
      %v644 = vsel %vm555, %v599, 0
      %v647 = vsel %vm555, %v601, 0
      %v650 = vsel %vm555, %v603, 0
      %652 = vmatprep.subr.mxu0 0.0
      %653 = vmatpush1.msra.mxu0 %v377
      %654 = vmatprep.subr.mxu0 0.0
      %655 = vmatpush1.msra.mxu0 %v382
      %656 = vmatprep.subr.mxu0 0.0
      %657 = vmatpush1.msra.mxu0 %v387
      %658 = vmatprep.subr.mxu0 0.0
      %659 = vmatpush1.msra.mxu0 %v392
      %660 = vmatprep.subr.mxu0 0.0
      %661 = vmatpush1.msra.mxu0 %v397
      %662 = vmatprep.subr.mxu0 0.0
      %663 = vmatpush1.msra.mxu0 %v402
      %664 = vmatprep.subr.mxu0 0.0
      %665 = vmatpush1.msra.mxu0 %v407
      %666 = vmatprep.subr.mxu0 0.0
      %667 = vmatpush1.msra.mxu0 %v412
      %668 = vmatprep.subr.mxu0 0.0
      %669 = vmatpush1.msra.mxu0 0.0
      %670 = vmatprep.subr.mxu0 0.0
      %671 = vmatpush1.msra.mxu0 0.0
      %672 = vmatprep.subr.mxu0 0.0
      %673 = vmatpush1.msra.mxu0 0.0
      %674 = vmatprep.subr.mxu0 0.0
      %675 = vmatpush1.msra.mxu0 0.0
      %676 = vmatprep.subr.mxu0 0.0
      %677 = vmatpush1.msra.mxu0 0.0
      %678 = vmatprep.subr.mxu0 0.0
      %679 = vmatpush1.msra.mxu0 0.0
      %680 = vmatprep.subr.mxu0 0.0
      %681 = vmatpush1.msra.mxu0 0.0
      %682 = vmatprep.subr.mxu0 0.0
      %683 = vmatpush1.msra.mxu0 0.0
      %684 = vmatprep.subr.mxu0 0.0
      %685 = vmatpush1.msra.mxu0 0.0
      %686 = vmatprep.subr.mxu0 0.0
      %687 = vmatpush1.msra.mxu0 0.0
      %688 = vmatprep.subr.mxu0 0.0
      %689 = vmatpush1.msra.mxu0 0.0
      %690 = vmatprep.subr.mxu0 0.0
      %691 = vmatpush1.msra.mxu0 0.0
      %692 = vmatprep.subr.mxu0 0.0
      %693 = vmatpush1.msra.mxu0 0.0
      %694 = vmatprep.subr.mxu0 0.0
      %695 = vmatpush1.msra.mxu0 0.0
      %696 = vmatprep.subr.mxu0 0.0
      %697 = vmatpush1.msra.mxu0 0.0
      %698 = vmatprep.subr.mxu0 0.0
      %699 = vmatpush1.msra.mxu0 0.0
      %700 = vmatprep.subr.mxu0 0.0
      %701 = vmatpush1.msra.mxu0 0.0
      %702 = vmatprep.subr.mxu0 0.0
      %703 = vmatpush1.msra.mxu0 0.0
      %704 = vmatprep.subr.mxu0 0.0
      %705 = vmatpush1.msra.mxu0 0.0
      %706 = vmatprep.subr.mxu0 0.0
      %707 = vmatpush1.msra.mxu0 0.0
      %708 = vmatprep.subr.mxu0 0.0
      %709 = vmatpush1.msra.mxu0 0.0
      %710 = vmatprep.subr.mxu0 0.0
      %711 = vmatpush1.msra.mxu0 0.0
      %712 = vmatprep.subr.mxu0 0.0
      %713 = vmatpush1.msra.mxu0 0.0
      %714 = vmatprep.subr.mxu0 0.0
      %715 = vmatpush1.msra.mxu0 0.0
      %716 = vmatprep.mubr.f32.mxu0 0.0
      %717 = vmatmul.mubr.f32.gmra.mrb[0].mxu0 %v629
      %v718 = vpop.f32.mrb[0].mxu0
      %v719 = vadd.f32 0.0, %v718
      %v720 = vpop.f32.mrb[0].mxu0
      %721 = vmatprep.mubr.f32.mxu0 0.0
      %722 = vmatmul.mubr.f32.gmra.mrb[0].mxu0 %v632
      %v723 = vpop.f32.mrb[0].mxu0
      %v724 = vadd.f32 0.0, %v723
      %v725 = vpop.f32.mrb[0].mxu0
      %726 = vmatprep.mubr.f32.mxu0 0.0
      %727 = vmatmul.mubr.f32.gmra.mrb[0].mxu0 %v635
      %v728 = vpop.f32.mrb[0].mxu0
      %v729 = vadd.f32 0.0, %v728
      %v730 = vpop.f32.mrb[0].mxu0
      %731 = vmatprep.mubr.f32.mxu0 0.0
      %732 = vmatmul.mubr.f32.gmra.mrb[0].mxu0 %v638
      %v733 = vpop.f32.mrb[0].mxu0
      %v734 = vadd.f32 0.0, %v733
      %v735 = vpop.f32.mrb[0].mxu0
      %736 = vmatprep.mubr.f32.mxu0 0.0
      %737 = vmatmul.mubr.f32.gmra.mrb[0].mxu0 %v641
      %v738 = vpop.f32.mrb[0].mxu0
      %v739 = vadd.f32 0.0, %v738
      %v740 = vpop.f32.mrb[0].mxu0
      %741 = vmatprep.mubr.f32.mxu0 0.0
      %742 = vmatmul.mubr.f32.gmra.mrb[0].mxu0 %v644
      %v743 = vpop.f32.mrb[0].mxu0
      %v744 = vadd.f32 0.0, %v743
      %v745 = vpop.f32.mrb[0].mxu0
      %746 = vmatprep.mubr.f32.mxu0 0.0
      %747 = vmatmul.mubr.f32.gmra.mrb[0].mxu0 %v647
      %v748 = vpop.f32.mrb[0].mxu0
      %v749 = vadd.f32 0.0, %v748
      %v750 = vpop.f32.mrb[0].mxu0
      %751 = vmatprep.mubr.f32.mxu0 0.0
      %752 = vmatmul.mubr.f32.gmra.mrb[0].mxu0 %v650
      %v753 = vpop.f32.mrb[0].mxu0
      %v754 = vadd.f32 0.0, %v753
      %v755 = vpop.f32.mrb[0].mxu0
      %756 = vdwg.mxu0
      %v757 = vrcp.pop %v606
      %v758 = vrcp.pop %v609
      %v759 = vrcp.pop %v612
      %v760 = vrcp.pop %v615
      %v761 = vrcp.pop %v618
      %v762 = vrcp.pop %v621
      %v763 = vrcp.pop %v624
      %v764 = vrcp.pop %v627
      %v765 = vmul.f32 %v719, %v757
      %v766 = vmul.f32 %v724, %v758
      %v767 = vmul.f32 %v729, %v759
      %v768 = vmul.f32 %v734, %v760
      %v769 = vmul.f32 %v739, %v761
      %v770 = vmul.f32 %v744, %v762
      %v771 = vmul.f32 %v749, %v763
      %v772 = vmul.f32 %v754, %v764
      %v773 = vmax.f32 %v765, 0.0
      %v774 = vmax.f32 %v766, 0.0
      %v775 = vmax.f32 %v767, 0.0
      %v776 = vmax.f32 %v768, 0.0
      %v777 = vmax.f32 %v769, 0.0
      %v778 = vmax.f32 %v770, 0.0
      %v779 = vmax.f32 %v771, 0.0
      %v780 = vmax.f32 %v772, 0.0
      %v781 = vld [vmem:[%s259] sm:$0xff]
      %v782 = vld [vmem:[%s259 + $0x8] sm:$0xff]
      %v783 = vld [vmem:[%s259 + $0x10] sm:$0xff]
      %v784 = vld [vmem:[%s259 + $0x18] sm:$0xff]
      %v785 = vld [vmem:[%s259 + $0x20] sm:$0xff]
      %v786 = vld [vmem:[%s259 + $0x28] sm:$0xff]
      %v787 = vld [vmem:[%s259 + $0x30] sm:$0xff]
      %v788 = vld [vmem:[%s259 + $0x38] sm:$0xff]
      %v789 = vmul.f32 %v773, %v781
      %v790 = vmul.f32 %v774, %v782
      %v791 = vmul.f32 %v775, %v783
      %v792 = vmul.f32 %v776, %v784
      %v793 = vmul.f32 %v777, %v785
      %v794 = vmul.f32 %v778, %v786
      %v795 = vmul.f32 %v779, %v787
      %v796 = vmul.f32 %v780, %v788
      %v797 = vld [vmem:[%s4] sm:$0xff]
      %v798 = vld [vmem:[%s4 + $0x8] sm:$0xff]
      %v799 = vld [vmem:[%s4 + $0x10] sm:$0xff]
      %v800 = vld [vmem:[%s4 + $0x18] sm:$0xff]
      %v802 = vsel %vm285, %v789, 0
      %v805 = vsel %vm285, %v790, 0
      %v808 = vsel %vm285, %v791, 0
      %v811 = vsel %vm285, %v792, 0
      %v814 = vsel %vm285, %v793, 0
      %v817 = vsel %vm285, %v794, 0
      %v820 = vsel %vm285, %v795, 0
      %v823 = vsel %vm285, %v796, 0
      %825 = vmatprep.subr.mxu0 0.0
      %826 = vmatpush1.msra.mxu0 %v797
      %827 = vmatprep.subr.mxu0 0.0
      %828 = vmatpush1.msra.mxu0 %v798
      %829 = vmatprep.subr.mxu0 0.0
      %830 = vmatpush1.msra.mxu0 %v799
      %831 = vmatprep.subr.mxu0 0.0
      %832 = vmatpush1.msra.mxu0 %v800
      %833 = vmatprep.subr.mxu0 0.0
      %834 = vmatpush1.msra.mxu0 0.0
      %835 = vmatprep.subr.mxu0 0.0
      %836 = vmatpush1.msra.mxu0 0.0
      %837 = vmatprep.subr.mxu0 0.0
      %838 = vmatpush1.msra.mxu0 0.0
      %839 = vmatprep.subr.mxu0 0.0
      %840 = vmatpush1.msra.mxu0 0.0
      %841 = vmatprep.subr.mxu0 0.0
      %842 = vmatpush1.msra.mxu0 0.0
      %843 = vmatprep.subr.mxu0 0.0
      %844 = vmatpush1.msra.mxu0 0.0
      %845 = vmatprep.subr.mxu0 0.0
      %846 = vmatpush1.msra.mxu0 0.0
      %847 = vmatprep.subr.mxu0 0.0
      %848 = vmatpush1.msra.mxu0 0.0
      %849 = vmatprep.subr.mxu0 0.0
      %850 = vmatpush1.msra.mxu0 0.0
      %851 = vmatprep.subr.mxu0 0.0
      %852 = vmatpush1.msra.mxu0 0.0
      %853 = vmatprep.subr.mxu0 0.0
      %854 = vmatpush1.msra.mxu0 0.0
      %855 = vmatprep.subr.mxu0 0.0
      %856 = vmatpush1.msra.mxu0 0.0
      %857 = vmatprep.subr.mxu0 0.0
      %858 = vmatpush1.msra.mxu0 0.0
      %859 = vmatprep.subr.mxu0 0.0
      %860 = vmatpush1.msra.mxu0 0.0
      %861 = vmatprep.subr.mxu0 0.0
      %862 = vmatpush1.msra.mxu0 0.0
      %863 = vmatprep.subr.mxu0 0.0
      %864 = vmatpush1.msra.mxu0 0.0
      %865 = vmatprep.subr.mxu0 0.0
      %866 = vmatpush1.msra.mxu0 0.0
      %867 = vmatprep.subr.mxu0 0.0
      %868 = vmatpush1.msra.mxu0 0.0
      %869 = vmatprep.subr.mxu0 0.0
      %870 = vmatpush1.msra.mxu0 0.0
      %871 = vmatprep.subr.mxu0 0.0
      %872 = vmatpush1.msra.mxu0 0.0
      %873 = vmatprep.subr.mxu0 0.0
      %874 = vmatpush1.msra.mxu0 0.0
      %875 = vmatprep.subr.mxu0 0.0
      %876 = vmatpush1.msra.mxu0 0.0
      %877 = vmatprep.subr.mxu0 0.0
      %878 = vmatpush1.msra.mxu0 0.0
      %879 = vmatprep.subr.mxu0 0.0
      %880 = vmatpush1.msra.mxu0 0.0
      %881 = vmatprep.subr.mxu0 0.0
      %882 = vmatpush1.msra.mxu0 0.0
      %883 = vmatprep.subr.mxu0 0.0
      %884 = vmatpush1.msra.mxu0 0.0
      %885 = vmatprep.subr.mxu0 0.0
      %886 = vmatpush1.msra.mxu0 0.0
      %887 = vmatprep.subr.mxu0 0.0
      %888 = vmatpush1.msra.mxu0 0.0
      %889 = vmatprep.mubr.f32.mxu0 0.0
      %890 = vmatmul.mubr.f32.gmra.mrb[0].mxu0 %v802
      %v891 = vpop.f32.mrb[0].mxu0
      %v892 = vadd.f32 0.0, %v891
      %v893 = vpop.f32.mrb[0].mxu0
      %894 = vmatprep.mubr.f32.mxu0 0.0
      %895 = vmatmul.mubr.f32.gmra.mrb[0].mxu0 %v805
      %v896 = vpop.f32.mrb[0].mxu0
      %v897 = vadd.f32 0.0, %v896
      %v898 = vpop.f32.mrb[0].mxu0
      %899 = vmatprep.mubr.f32.mxu0 0.0
      %900 = vmatmul.mubr.f32.gmra.mrb[0].mxu0 %v808
      %v901 = vpop.f32.mrb[0].mxu0
      %v902 = vadd.f32 0.0, %v901
      %v903 = vpop.f32.mrb[0].mxu0
      %904 = vmatprep.mubr.f32.mxu0 0.0
      %905 = vmatmul.mubr.f32.gmra.mrb[0].mxu0 %v811
      %v906 = vpop.f32.mrb[0].mxu0
      %v907 = vadd.f32 0.0, %v906
      %v908 = vpop.f32.mrb[0].mxu0
      %909 = vmatprep.mubr.f32.mxu0 0.0
      %910 = vmatmul.mubr.f32.gmra.mrb[0].mxu0 %v814
      %v911 = vpop.f32.mrb[0].mxu0
      %v912 = vadd.f32 0.0, %v911
      %v913 = vpop.f32.mrb[0].mxu0
      %914 = vmatprep.mubr.f32.mxu0 0.0
      %915 = vmatmul.mubr.f32.gmra.mrb[0].mxu0 %v817
      %v916 = vpop.f32.mrb[0].mxu0
      %v917 = vadd.f32 0.0, %v916
      %v918 = vpop.f32.mrb[0].mxu0
      %919 = vmatprep.mubr.f32.mxu0 0.0
      %920 = vmatmul.mubr.f32.gmra.mrb[0].mxu0 %v820
      %v921 = vpop.f32.mrb[0].mxu0
      %v922 = vadd.f32 0.0, %v921
      %v923 = vpop.f32.mrb[0].mxu0
      %924 = vmatprep.mubr.f32.mxu0 0.0
      %925 = vmatmul.mubr.f32.gmra.mrb[0].mxu0 %v823
      %v926 = vpop.f32.mrb[0].mxu0
      %v927 = vadd.f32 0.0, %v926
      %v928 = vpop.f32.mrb[0].mxu0
      %929 = vdwg.mxu0
      %938 = vrot.lane.b32.xlu0 %v892, 111
      %v939 = vpop.permute.xlu0 %938
      %940 = vrot.lane.b32.xlu0 %v897, 111
      %v941 = vpop.permute.xlu0 %940
      %942 = vrot.lane.b32.xlu0 %v902, 111
      %v943 = vpop.permute.xlu0 %942
      %944 = vrot.lane.b32.xlu0 %v907, 111
      %v945 = vpop.permute.xlu0 %944
      %946 = vrot.lane.b32.xlu0 %v912, 111
      %v947 = vpop.permute.xlu0 %946
      %948 = vrot.lane.b32.xlu0 %v917, 111
      %v949 = vpop.permute.xlu0 %948
      %950 = vrot.lane.b32.xlu0 %v922, 111
      %v951 = vpop.permute.xlu0 %950
      %952 = vrot.lane.b32.xlu0 %v927, 111
      %v953 = vpop.permute.xlu0 %952
      %962 = vxpose.xlu0.b32.start [1/16] %v939, 128
      %963 = vxpose.xlu0.b32.cont [2/16] %v941, 128
      %964 = vxpose.xlu0.b32.cont [3/16] %v943, 128
      %965 = vxpose.xlu0.b32.cont [4/16] %v945, 128
      %966 = vxpose.xlu0.b32.cont [5/16] %v947, 128
      %967 = vxpose.xlu0.b32.cont [6/16] %v949, 128
      %968 = vxpose.xlu0.b32.cont [7/16] %v951, 128
      %969 = vxpose.xlu0.b32.cont [8/16] %v953, 128
      %970 = vxpose.xlu0.b32.cont [9/16] 0.0, 128
      %971 = vxpose.xlu0.b32.cont [10/16] 0.0, 128
      %972 = vxpose.xlu0.b32.cont [11/16] 0.0, 128
      %973 = vxpose.xlu0.b32.cont [12/16] 0.0, 128
      %974 = vxpose.xlu0.b32.cont [13/16] 0.0, 128
      %975 = vxpose.xlu0.b32.cont [14/16] 0.0, 128
      %976 = vxpose.xlu0.b32.cont [15/16] 0.0, 128
      %977 = vxpose.xlu0.b32.end [16/16] 0.0, 128
      %v978 = vpop.trf.xlu0
      %v979 = vpop.trf.xlu0
      %v980 = vpop.trf.xlu0
      %v981 = vpop.trf.xlu0
      %v982 = vpop.trf.xlu0
      %v983 = vpop.trf.xlu0
      %v984 = vpop.trf.xlu0
      %v985 = vpop.trf.xlu0
      %v986 = vpop.trf.xlu0
      %v987 = vpop.trf.xlu0
      %v988 = vpop.trf.xlu0
      %v989 = vpop.trf.xlu0
      %v990 = vpop.trf.xlu0
      %v991 = vpop.trf.xlu0
      %v992 = vpop.trf.xlu0
      %v993 = vpop.trf.xlu0
      %994 = vset.pattern.permute.xlu0 16
      %995 = vperm.xlu0 %994, %v892
      %v996 = vpop.permute.xlu0 %995
      %998 = vset.pattern.permute.xlu0 16
      %999 = vperm.xlu0 %998, %v897
      %v1000 = vpop.permute.xlu0 %999
      %1002 = vset.pattern.permute.xlu0 16
      %1003 = vperm.xlu0 %1002, %v902
      %v1004 = vpop.permute.xlu0 %1003
      %1006 = vset.pattern.permute.xlu0 16
      %1007 = vperm.xlu0 %1006, %v907
      %v1008 = vpop.permute.xlu0 %1007
      %1010 = vset.pattern.permute.xlu0 16
      %1011 = vperm.xlu0 %1010, %v912
      %v1012 = vpop.permute.xlu0 %1011
      %1014 = vset.pattern.permute.xlu0 16
      %1015 = vperm.xlu0 %1014, %v917
      %v1016 = vpop.permute.xlu0 %1015
      %1018 = vset.pattern.permute.xlu0 16
      %1019 = vperm.xlu0 %1018, %v922
      %v1020 = vpop.permute.xlu0 %1019
      %1022 = vset.pattern.permute.xlu0 16
      %1023 = vperm.xlu0 %1022, %v927
      %v1024 = vpop.permute.xlu0 %1023
      %v1026 = vlaneseq
      %v1027 = vshrl.u32 %v1026, 7
      %v1028 = vsub.s32 0, %v1027
      %v1029 = vrot.slane %v978, %v1028
      %v1030 = vadd.f32 %v996, %v1029
      %v1031 = vadd.f32 %v1000, %v1029
      %v1032 = vadd.f32 %v1004, %v1029
      %v1033 = vadd.f32 %v1008, %v1029
      %v1034 = vadd.f32 %v1012, %v1029
      %v1035 = vadd.f32 %v1016, %v1029
      %v1036 = vadd.f32 %v1020, %v1029
      %v1037 = vadd.f32 %v1024, %v1029
      %vm1038 = vcmp.gt.f32.partialorder %v1030, 0.0
      %vm1039 = vcmp.gt.f32.partialorder %v1031, 0.0
      %vm1040 = vcmp.gt.f32.partialorder %v1032, 0.0
      %vm1041 = vcmp.gt.f32.partialorder %v1033, 0.0
      %vm1042 = vcmp.gt.f32.partialorder %v1034, 0.0
      %vm1043 = vcmp.gt.f32.partialorder %v1035, 0.0
      %vm1044 = vcmp.gt.f32.partialorder %v1036, 0.0
      %vm1045 = vcmp.gt.f32.partialorder %v1037, 0.0
      %v1046 = vmul.f32 %v1030, 0.2
      %v1047 = vmul.f32 %v1031, 0.2
      %v1048 = vmul.f32 %v1032, 0.2
      %v1049 = vmul.f32 %v1033, 0.2
      %v1050 = vmul.f32 %v1034, 0.2
      %v1051 = vmul.f32 %v1035, 0.2
      %v1052 = vmul.f32 %v1036, 0.2
      %v1053 = vmul.f32 %v1037, 0.2
      %v1054 = vsel %vm1038, %v1030, %v1046
      %v1055 = vsel %vm1039, %v1031, %v1047
      %v1056 = vsel %vm1040, %v1032, %v1048
      %v1057 = vsel %vm1041, %v1033, %v1049
      %v1058 = vsel %vm1042, %v1034, %v1050
      %v1059 = vsel %vm1043, %v1035, %v1051
      %v1060 = vsel %vm1044, %v1036, %v1052
      %v1061 = vsel %vm1045, %v1037, %v1053
      %v1062 = vadd.f32 %v1054, %v273
      %v1063 = vadd.f32 %v1055, %v274
      %v1064 = vadd.f32 %v1056, %v275
      %v1065 = vadd.f32 %v1057, %v276
      %v1066 = vadd.f32 %v1058, %v277
      %v1067 = vadd.f32 %v1059, %v278
      %v1068 = vadd.f32 %v1060, %v279
      %v1069 = vadd.f32 %v1061, %v280
      %v1070 = vsel %vm555, %v1062, -inf
      %1071 = vmax.xlane.f32.xlu0 %v1070
      %v1072 = vpop.xlane.xlu0 %1071
      %v1073 = vsel %vm555, %v1063, -inf
      %1074 = vmax.xlane.f32.xlu0 %v1073
      %v1075 = vpop.xlane.xlu0 %1074
      %v1076 = vsel %vm555, %v1064, -inf
      %1077 = vmax.xlane.f32.xlu0 %v1076
      %v1078 = vpop.xlane.xlu0 %1077
      %v1079 = vsel %vm555, %v1065, -inf
      %1080 = vmax.xlane.f32.xlu0 %v1079
      %v1081 = vpop.xlane.xlu0 %1080
      %v1082 = vsel %vm555, %v1066, -inf
      %1083 = vmax.xlane.f32.xlu0 %v1082
      %v1084 = vpop.xlane.xlu0 %1083
      %v1085 = vsel %vm555, %v1067, -inf
      %1086 = vmax.xlane.f32.xlu0 %v1085
      %v1087 = vpop.xlane.xlu0 %1086
      %v1088 = vsel %vm555, %v1068, -inf
      %1089 = vmax.xlane.f32.xlu0 %v1088
      %v1090 = vpop.xlane.xlu0 %1089
      %v1091 = vsel %vm555, %v1069, -inf
      %1092 = vmax.xlane.f32.xlu0 %v1091
      %v1093 = vpop.xlane.xlu0 %1092
      %v1094 = vsub.f32 %v1062, %v1072
      %v1095 = vsub.f32 %v1063, %v1075
      %v1096 = vsub.f32 %v1064, %v1078
      %v1097 = vsub.f32 %v1065, %v1081
      %v1098 = vsub.f32 %v1066, %v1084
      %v1099 = vsub.f32 %v1067, %v1087
      %v1100 = vsub.f32 %v1068, %v1090
      %v1101 = vsub.f32 %v1069, %v1093
      %v1102 = vmul.f32 %v1094, 1.442695
      %v1103 = vpow.pop %v1102
      %v1104 = vmul.f32 %v1095, 1.442695
      %v1105 = vpow.pop %v1104
      %v1106 = vmul.f32 %v1096, 1.442695
      %v1107 = vpow.pop %v1106
      %v1108 = vmul.f32 %v1097, 1.442695
      %v1109 = vpow.pop %v1108
      %v1110 = vmul.f32 %v1098, 1.442695
      %v1111 = vpow.pop %v1110
      %v1112 = vmul.f32 %v1099, 1.442695
      %v1113 = vpow.pop %v1112
      %v1114 = vmul.f32 %v1100, 1.442695
      %v1115 = vpow.pop %v1114
      %v1116 = vmul.f32 %v1101, 1.442695
      %v1117 = vpow.pop %v1116
      %v1118 = vsel %vm555, %v1103, 0.0
      %1119 = vadd.xlane.f32.xlu0 %v1118
      %v1120 = vpop.xlane.xlu0 %1119
      %v1121 = vsel %vm555, %v1105, 0.0
      %1122 = vadd.xlane.f32.xlu0 %v1121
      %v1123 = vpop.xlane.xlu0 %1122
      %v1124 = vsel %vm555, %v1107, 0.0
      %1125 = vadd.xlane.f32.xlu0 %v1124
      %v1126 = vpop.xlane.xlu0 %1125
      %v1127 = vsel %vm555, %v1109, 0.0
      %1128 = vadd.xlane.f32.xlu0 %v1127
      %v1129 = vpop.xlane.xlu0 %1128
      %v1130 = vsel %vm555, %v1111, 0.0
      %1131 = vadd.xlane.f32.xlu0 %v1130
      %v1132 = vpop.xlane.xlu0 %1131
      %v1133 = vsel %vm555, %v1113, 0.0
      %1134 = vadd.xlane.f32.xlu0 %v1133
      %v1135 = vpop.xlane.xlu0 %1134
      %v1136 = vsel %vm555, %v1115, 0.0
      %1137 = vadd.xlane.f32.xlu0 %v1136
      %v1138 = vpop.xlane.xlu0 %1137
      %v1139 = vsel %vm555, %v1117, 0.0
      %1140 = vadd.xlane.f32.xlu0 %v1139
      %v1141 = vpop.xlane.xlu0 %1140
      %v1143 = vsel %vm555, %v1103, 0
      %v1146 = vsel %vm555, %v1105, 0
      %v1149 = vsel %vm555, %v1107, 0
      %v1152 = vsel %vm555, %v1109, 0
      %v1155 = vsel %vm555, %v1111, 0
      %v1158 = vsel %vm555, %v1113, 0
      %v1161 = vsel %vm555, %v1115, 0
      %v1164 = vsel %vm555, %v1117, 0
      %1166 = vmatprep.subr.mxu0 0.0
      %1167 = vmatpush1.msra.mxu0 %v892
      %1168 = vmatprep.subr.mxu0 0.0
      %1169 = vmatpush1.msra.mxu0 %v897
      %1170 = vmatprep.subr.mxu0 0.0
      %1171 = vmatpush1.msra.mxu0 %v902
      %1172 = vmatprep.subr.mxu0 0.0
      %1173 = vmatpush1.msra.mxu0 %v907
      %1174 = vmatprep.subr.mxu0 0.0
      %1175 = vmatpush1.msra.mxu0 %v912
      %1176 = vmatprep.subr.mxu0 0.0
      %1177 = vmatpush1.msra.mxu0 %v917
      %1178 = vmatprep.subr.mxu0 0.0
      %1179 = vmatpush1.msra.mxu0 %v922
      %1180 = vmatprep.subr.mxu0 0.0
      %1181 = vmatpush1.msra.mxu0 %v927
      %1182 = vmatprep.subr.mxu0 0.0
      %1183 = vmatpush1.msra.mxu0 0.0
      %1184 = vmatprep.subr.mxu0 0.0
      %1185 = vmatpush1.msra.mxu0 0.0
      %1186 = vmatprep.subr.mxu0 0.0
      %1187 = vmatpush1.msra.mxu0 0.0
      %1188 = vmatprep.subr.mxu0 0.0
      %1189 = vmatpush1.msra.mxu0 0.0
      %1190 = vmatprep.subr.mxu0 0.0
      %1191 = vmatpush1.msra.mxu0 0.0
      %1192 = vmatprep.subr.mxu0 0.0
      %1193 = vmatpush1.msra.mxu0 0.0
      %1194 = vmatprep.subr.mxu0 0.0
      %1195 = vmatpush1.msra.mxu0 0.0
      %1196 = vmatprep.subr.mxu0 0.0
      %1197 = vmatpush1.msra.mxu0 0.0
      %1198 = vmatprep.subr.mxu0 0.0
      %1199 = vmatpush1.msra.mxu0 0.0
      %1200 = vmatprep.subr.mxu0 0.0
      %1201 = vmatpush1.msra.mxu0 0.0
      %1202 = vmatprep.subr.mxu0 0.0
      %1203 = vmatpush1.msra.mxu0 0.0
      %1204 = vmatprep.subr.mxu0 0.0
      %1205 = vmatpush1.msra.mxu0 0.0
      %1206 = vmatprep.subr.mxu0 0.0
      %1207 = vmatpush1.msra.mxu0 0.0
      %1208 = vmatprep.subr.mxu0 0.0
      %1209 = vmatpush1.msra.mxu0 0.0
      %1210 = vmatprep.subr.mxu0 0.0
      %1211 = vmatpush1.msra.mxu0 0.0
      %1212 = vmatprep.subr.mxu0 0.0
      %1213 = vmatpush1.msra.mxu0 0.0
      %1214 = vmatprep.subr.mxu0 0.0
      %1215 = vmatpush1.msra.mxu0 0.0
      %1216 = vmatprep.subr.mxu0 0.0
      %1217 = vmatpush1.msra.mxu0 0.0
      %1218 = vmatprep.subr.mxu0 0.0
      %1219 = vmatpush1.msra.mxu0 0.0
      %1220 = vmatprep.subr.mxu0 0.0
      %1221 = vmatpush1.msra.mxu0 0.0
      %1222 = vmatprep.subr.mxu0 0.0
      %1223 = vmatpush1.msra.mxu0 0.0
      %1224 = vmatprep.subr.mxu0 0.0
      %1225 = vmatpush1.msra.mxu0 0.0
      %1226 = vmatprep.subr.mxu0 0.0
      %1227 = vmatpush1.msra.mxu0 0.0
      %1228 = vmatprep.subr.mxu0 0.0
      %1229 = vmatpush1.msra.mxu0 0.0
      %1230 = vmatprep.mubr.f32.mxu0 0.0
      %1231 = vmatmul.mubr.f32.gmra.mrb[0].mxu0 %v1143
      %v1232 = vpop.f32.mrb[0].mxu0
      %v1233 = vadd.f32 0.0, %v1232
      %v1234 = vpop.f32.mrb[0].mxu0
      %1235 = vmatprep.mubr.f32.mxu0 0.0
      %1236 = vmatmul.mubr.f32.gmra.mrb[0].mxu0 %v1146
      %v1237 = vpop.f32.mrb[0].mxu0
      %v1238 = vadd.f32 0.0, %v1237
      %v1239 = vpop.f32.mrb[0].mxu0
      %1240 = vmatprep.mubr.f32.mxu0 0.0
      %1241 = vmatmul.mubr.f32.gmra.mrb[0].mxu0 %v1149
      %v1242 = vpop.f32.mrb[0].mxu0
      %v1243 = vadd.f32 0.0, %v1242
      %v1244 = vpop.f32.mrb[0].mxu0
      %1245 = vmatprep.mubr.f32.mxu0 0.0
      %1246 = vmatmul.mubr.f32.gmra.mrb[0].mxu0 %v1152
      %v1247 = vpop.f32.mrb[0].mxu0
      %v1248 = vadd.f32 0.0, %v1247
      %v1249 = vpop.f32.mrb[0].mxu0
      %1250 = vmatprep.mubr.f32.mxu0 0.0
      %1251 = vmatmul.mubr.f32.gmra.mrb[0].mxu0 %v1155
      %v1252 = vpop.f32.mrb[0].mxu0
      %v1253 = vadd.f32 0.0, %v1252
      %v1254 = vpop.f32.mrb[0].mxu0
      %1255 = vmatprep.mubr.f32.mxu0 0.0
      %1256 = vmatmul.mubr.f32.gmra.mrb[0].mxu0 %v1158
      %v1257 = vpop.f32.mrb[0].mxu0
      %v1258 = vadd.f32 0.0, %v1257
      %v1259 = vpop.f32.mrb[0].mxu0
      %1260 = vmatprep.mubr.f32.mxu0 0.0
      %1261 = vmatmul.mubr.f32.gmra.mrb[0].mxu0 %v1161
      %v1262 = vpop.f32.mrb[0].mxu0
      %v1263 = vadd.f32 0.0, %v1262
      %v1264 = vpop.f32.mrb[0].mxu0
      %1265 = vmatprep.mubr.f32.mxu0 0.0
      %1266 = vmatmul.mubr.f32.gmra.mrb[0].mxu0 %v1164
      %v1267 = vpop.f32.mrb[0].mxu0
      %v1268 = vadd.f32 0.0, %v1267
      %v1269 = vpop.f32.mrb[0].mxu0
      %1270 = vdwg.mxu0
      %v1271 = vrcp.pop %v1120
      %v1272 = vrcp.pop %v1123
      %v1273 = vrcp.pop %v1126
      %v1274 = vrcp.pop %v1129
      %v1275 = vrcp.pop %v1132
      %v1276 = vrcp.pop %v1135
      %v1277 = vrcp.pop %v1138
      %v1278 = vrcp.pop %v1141
      %v1279 = vmul.f32 %v1233, %v1271
      %v1280 = vmul.f32 %v1238, %v1272
      %v1281 = vmul.f32 %v1243, %v1273
      %v1282 = vmul.f32 %v1248, %v1274
      %v1283 = vmul.f32 %v1253, %v1275
      %v1284 = vmul.f32 %v1258, %v1276
      %v1285 = vmul.f32 %v1263, %v1277
      %v1286 = vmul.f32 %v1268, %v1278
      %v1287 = vmax.f32 %v1279, 0.0
      %v1288 = vmax.f32 %v1280, 0.0
      %v1289 = vmax.f32 %v1281, 0.0
      %v1290 = vmax.f32 %v1282, 0.0
      %v1291 = vmax.f32 %v1283, 0.0
      %v1292 = vmax.f32 %v1284, 0.0
      %v1293 = vmax.f32 %v1285, 0.0
      %v1294 = vmax.f32 %v1286, 0.0
      %vm1295 = vcmask 130048
      %1296 = vst.msk [vmem:[%s264] sm:$0xff] %vm1295, %v1287
      %1297 = vst.msk [vmem:[%s264 + $0x8] sm:$0xff] %vm1295, %v1288
      %1298 = vst.msk [vmem:[%s264 + $0x10] sm:$0xff] %vm1295, %v1289
      %1299 = vst.msk [vmem:[%s264 + $0x18] sm:$0xff] %vm1295, %v1290
      %1300 = vst.msk [vmem:[%s264 + $0x20] sm:$0xff] %vm1295, %v1291
      %1301 = vst.msk [vmem:[%s264 + $0x28] sm:$0xff] %vm1295, %v1292
      %1302 = vst.msk [vmem:[%s264 + $0x30] sm:$0xff] %vm1295, %v1293
      %1303 = vst.msk [vmem:[%s264 + $0x38] sm:$0xff] %vm1295, %v1294
      %p1304 = scmp.lt.s32.totalorder %s16, 1
      %s1305 = scalar_select %p1304, %s16, 1
      %s1306 = smul.addr %s1305, 8
      %s1307 = smul.addr %s1306, 8
      %s1308 = scalar_lea.vmem %s5, %s1307
      // Predicated region
      $region41: #{tpu_custom_call.1} parent=39 // pred_check
        %p1309 = pneg %p154
      $region42: #{tpu_custom_call.1} parent=39 // pred_check_branch
        %1311 = sbr.rel (%p1309) target = $region44
      $region43: #{tpu_custom_call.1} parent=39 // pred_region
        _
      $region44: #{tpu_custom_call.1} parent=39 // pred_fallthru
        _
    $region40: #{tpu_custom_call.1} parent=5 // pred_fallthru
      _
    %p1312 = scmp.le.s32.totalorder 2, %s11
    // Predicated region
    $region45: #{tpu_custom_call.1} parent=5 // pred_check
      %p1313 = pneg %p1312
    $region46: #{tpu_custom_call.1} parent=5 // pred_check_branch
      %1315 = sbr.rel (%p1313) target = $region48
    $region47: #{tpu_custom_call.1} parent=5 // pred_region
      %s1316 = ssub.s32 %s11, 2
      // Predicated region
      $region49: #{tpu_custom_call.1} parent=47 // pred_check
        %p1317 = pneg %p160
      $region50: #{tpu_custom_call.1} parent=47 // pred_check_branch
        %1319 = sbr.rel (%p1317) target = $region52
      $region51: #{tpu_custom_call.1} parent=47 // pred_region
        %p1320 = scmp.lt.s32.totalorder %s17, 1
        %s1321 = scalar_select %p1320, %s17, 1
        %s1322 = smul.addr %s1321, 8
        %s1323 = smul.addr %s1322, 8
        %s1324 = scalar_lea.vmem %s5, %s1323
      $region52: #{tpu_custom_call.1} parent=47 // pred_fallthru
        _
    $region48: #{tpu_custom_call.1} parent=5 // pred_fallthru
      _
  $region6: #{tpu_custom_call.1} parent=0 // loop_footer
    %s15 = sadd.s32 1, %s11
  $region7: #{tpu_custom_call.1} parent=0 // loop_footer_branch
    %10 = sbr.rel target = $region3
  $region8: #{tpu_custom_call.1} parent=0 // loop_exit
    _

</llo_original>
